<compile_context>
chip_gen: v5e
topology: v5e:2x2
jax: 0.10.0
libtpu: 0.0.40
codegen_flags: <defaults>
</compile_context>

<pallas_src>
import jax
import jax.numpy as jnp
from jax.experimental import pallas as pl
from jax.experimental.pallas import tpu as pltpu


def _round_up(a, b):
    return (a + b - 1) // b * b


def _round_down(a, b):
    return a // b * b


def _pick_tile(n, row_bytes, align, target_bytes):
    """Batch-axis tile: ~target_bytes of x per block, `align`-aligned, and
    >=2 grid steps when n is large enough to split (v7x has 2 TensorCores)."""
    t = max(align, _round_down(target_bytes // max(row_bytes, 1), align))
    if n <= t:
        if n >= 2 * align:
            t = _round_up(pl.cdiv(n, 2), align)   # split so both TCs get work
        else:
            t = n                                 # single full-extent block
    return int(t)


# ---------------------------------------------------------------------------
# Kernels
# ---------------------------------------------------------------------------
def _kernel_batch_major(cw_ref, x_ref, w1_ref, b1_ref, w2_ref, b2_ref, o_ref):
    """Lane-dense layout: batch on the 128-lane axis.
       cw_ref: SMEM f32[4] = [conv_w0, conv_w1, conv_w2, conv_bias]
       x_ref : VMEM (L, TN)   -- one batch tile of x, transposed
       w1_ref: VMEM (M1, L)   (= W1^T), b1_ref: VMEM f32 (M1, 1)
       w2_ref: VMEM (O, M1)   (= W2^T), b2_ref: VMEM f32 (O, 1)
       o_ref : VMEM f32 (O, TN)"""
    x = x_ref[...]
    c0 = cw_ref[0].astype(x.dtype)
    c1 = cw_ref[1].astype(x.dtype)
    c2 = cw_ref[2].astype(x.dtype)
    cb = cw_ref[3].astype(x.dtype)

    # Conv1d(1->1, k=3, stride=1, padding=1): 3-tap stencil along the sublane
    # axis (L), in-register, zero row spliced at the boundary.
    zrow = jnp.zeros_like(x[:1, :])
    x_m1 = jnp.concatenate([zrow, x[:-1, :]], axis=0)   # x[j-1, :], 0 at j=0
    x_p1 = jnp.concatenate([x[1:, :], zrow], axis=0)    # x[j+1, :], 0 at j=L-1
    conv = c0 * x_m1 + c1 * x + c2 * x_p1 + cb

    h = jnp.where(conv >= 0, conv, 0.1 * conv)           # LeakyReLU(0.1), VPU

    # Linear(L -> M1): W1^T @ h, f32 accumulation on the MXU.
    w1 = w1_ref[...]
    h1 = jnp.dot(w1, h.astype(w1.dtype),
                 preferred_element_type=jnp.float32) + b1_ref[...]
    h1 = jnp.where(h1 >= 0, h1, 0.05 * h1)                # LeakyReLU(0.05)

    # Dropout(0.2): identity in eval/inference mode.
    # TODO(synk): training-mode dropout (pltpu.prng_seed + prng_random_bits
    #             mask with 1/0.8 scaling) not implemented.

    # Linear(M1 -> O) + Sigmoid (EUP); lane-dense (O, TN) store.
    w2 = w2_ref[...]
    h2 = jnp.dot(w2, h1.astype(w2.dtype),
                 preferred_element_type=jnp.float32) + b2_ref[...]
    o_ref[...] = jax.nn.sigmoid(h2)


def _kernel_feature_major(cw_ref, x_ref, w1_ref, b1_ref, w2_ref, b2_ref, o_ref):
    """Feature-dense layout (used when O >= 128 so stores are already dense).
       x_ref: (TN, L), w1_ref: (L, M1), b1_ref: (1, M1),
       w2_ref: (M1, O), b2_ref: (1, O), o_ref: (TN, O)"""
    x = x_ref[...]
    L_dim = x.shape[1]
    c0 = cw_ref[0].astype(x.dtype)
    c1 = cw_ref[1].astype(x.dtype)
    c2 = cw_ref[2].astype(x.dtype)
    cb = cw_ref[3].astype(x.dtype)

    if L_dim % 128 == 0:
        # Lane-axis shifts on the XLU (separate issue slot from the VPU),
        # boundary column zeroed with a single select.
        lane = jax.lax.broadcasted_iota(jnp.int32, x.shape, 1)
        x_m1 = jnp.where(lane == 0, 0.0, pltpu.roll(x, 1, axis=1))
        x_p1 = jnp.where(lane == L_dim - 1, 0.0, pltpu.roll(x, L_dim - 1, axis=1))
    else:
        zcol = jnp.zeros_like(x[:, :1])
        x_m1 = jnp.concatenate([zcol, x[:, :-1]], axis=1)
        x_p1 = jnp.concatenate([x[:, 1:], zcol], axis=1)
    conv = c0 * x_m1 + c1 * x + c2 * x_p1 + cb

    h = jnp.where(conv >= 0, conv, 0.1 * conv)

    w1 = w1_ref[...]
    h1 = jnp.dot(h.astype(w1.dtype), w1,
                 preferred_element_type=jnp.float32) + b1_ref[...]
    h1 = jnp.where(h1 >= 0, h1, 0.05 * h1)

    # Dropout(0.2): identity in eval mode (see TODO above).

    w2 = w2_ref[...]
    h2 = jnp.dot(h1.astype(w2.dtype), w2,
                 preferred_element_type=jnp.float32) + b2_ref[...]
    o_ref[...] = jax.nn.sigmoid(h2)


# ---------------------------------------------------------------------------
# Wrapper
# ---------------------------------------------------------------------------
def cnnnet_forward(x, params, *, x_compute_dtype=jnp.float32,
                   target_block_bytes=2 << 20):
    """x: (N, 1, L) float32 -- PyTorch NCL input for Conv1d(in_channels=1).
       Returns (N, 1, output) float32.
       x_compute_dtype: keep f32 on v5e (no bf16 VPU/EUP); jnp.bfloat16 is a
       valid choice on v6e/v7x for mem-bound large-N runs."""
    conv_w, conv_b, w1, b1, w2, b2 = params
    N, C, L = x.shape
    assert C == 1
    M1 = w1.shape[1]
    O = w2.shape[1]

    # Per-matmul MXU dtype gating: cast only when that dot's contraction dim
    # is MXU-sized; accumulation is always f32.
    d1 = jnp.bfloat16 if L >= 128 else jnp.float32
    d2 = jnp.bfloat16 if M1 >= 128 else jnp.float32
    x_bytes = jnp.dtype(x_compute_dtype).itemsize
    d1b, d2b = jnp.dtype(d1).itemsize, jnp.dtype(d2).itemsize

    cw = jnp.concatenate([conv_w.reshape(3), conv_b.reshape(1)]).astype(jnp.float32)
    x2d = x.reshape(N, L).astype(x_compute_dtype)

    # Tiny output => batch-on-lanes layout (lane-dense stores + dense VPU/EUP).
    batch_major = O < 128

    # Grid-invariant weights: single-buffer them when large (v7x has only
    # 64 MiB VMEM and default pipelining would hold two copies).
    weight_bytes = L * M1 * d1b + M1 * O * d2b + (M1 + O) * 4
    wspec_kw = {}
    weight_buffers = 2
    if weight_bytes > (8 << 20):
        wspec_kw = dict(pipeline_mode=pl.Buffered(1))
        weight_buffers = 1
        # TODO(synk): for very large L*M1 (>~24 MiB) add a K-tiling grid axis
        #             over L with an f32 VMEM accumulator instead of holding
        #             W1 whole in VMEM.

    if batch_major:
        align = 128                                  # batch sits on the lane axis
        tn = _pick_tile(N, L * x_bytes, align, target_block_bytes)
        grid = (pl.cdiv(N, tn),)
        xt = x2d.T                                   # (L, N)
        w1c = w1.T.astype(d1)                        # (M1, L)
        b1c = b1.reshape(M1, 1).astype(jnp.float32)
        w2c = w2.T.astype(d2)                        # (O, M1)
        b2c = b2.reshape(O, 1).astype(jnp.float32)
        in_specs = [
            pl.BlockSpec(memory_space=pltpu.MemorySpace.SMEM),            # conv scalars
            pl.BlockSpec((L, tn), lambda i: (0, i)),                      # x tile (pipelined)
            pl.BlockSpec((M1, L), lambda i: (0, 0), **wspec_kw),          # W1^T, VMEM-resident
            pl.BlockSpec((M1, 1), lambda i: (0, 0), **wspec_kw),          # b1
            pl.BlockSpec((O, M1), lambda i: (0, 0), **wspec_kw),          # W2^T
            pl.BlockSpec((O, 1), lambda i: (0, 0), **wspec_kw),           # b2
        ]
        out_specs = pl.BlockSpec((O, tn), lambda i: (0, i))
        out_shape = jax.ShapeDtypeStruct((O, N), jnp.float32)
        kernel = _kernel_batch_major
        operands = (cw, xt, w1c, b1c, w2c, b2c)
    else:
        align = 8                                    # batch sits on sublanes
        tn = _pick_tile(N, L * x_bytes, align, target_block_bytes)
        grid = (pl.cdiv(N, tn),)
        w1c = w1.astype(d1)
        b1c = b1.reshape(1, M1).astype(jnp.float32)
        w2c = w2.astype(d2)
        b2c = b2.reshape(1, O).astype(jnp.float32)
        in_specs = [
            pl.BlockSpec(memory_space=pltpu.MemorySpace.SMEM),
            pl.BlockSpec((tn, L), lambda i: (i, 0)),
            pl.BlockSpec((L, M1), lambda i: (0, 0), **wspec_kw),
            pl.BlockSpec((1, M1), lambda i: (0, 0), **wspec_kw),
            pl.BlockSpec((M1, O), lambda i: (0, 0), **wspec_kw),
            pl.BlockSpec((1, O), lambda i: (0, 0), **wspec_kw),
        ]
        out_specs = pl.BlockSpec((tn, O), lambda i: (i, 0))
        out_shape = jax.ShapeDtypeStruct((N, O), jnp.float32)
        kernel = _kernel_feature_major
        operands = (cw, x2d, w1c, b1c, w2c, b2c)

    # Capacity-aware scoped-VMEM budget (explicit: v5e default is only 16 MiB;
    # v7x physical VMEM is only 64 MiB so never ask for ~90% of it).
    est = (2 * tn * (L * x_bytes + O * 4)                 # double-buffered x/out tiles
           + weight_buffers * weight_bytes                # resident weights
           + tn * (6 * L + 2 * M1 + 2 * O) * 4)           # activation working set
    try:
        cap = int(pltpu.get_tpu_info().vmem_capacity_bytes)
    except Exception:                                     # pragma: no cover
        cap = 64 << 20                                    # conservative (v7x)
    cap_limit = cap * 3 // 4
    vmem_limit = int(min(cap_limit, max(min(32 << 20, cap_limit), 2 * est)))

    out = pl.pallas_call(
        kernel,
        out_shape=out_shape,
        grid=grid,
        in_specs=in_specs,
        out_specs=out_specs,
        compiler_params=pltpu.CompilerParams(
            dimension_semantics=("parallel",),    # batch axis; v7x: 2 TCs
            vmem_limit_bytes=vmem_limit,
        ),
    )(*operands)

    if batch_major:
        out = out.T                                        # (O, N) -> (N, O)
    return out.reshape(N, 1, O)


# ---------------------------------------------------------------------------
# Reference & params
# ---------------------------------------------------------------------------
def reference_forward(x, params):
    """Pure-JAX reference matching the PyTorch forward (eval mode)."""
    conv_w, conv_b, w1, b1, w2, b2 = params
    N, _, L = x.shape
    x2 = x.reshape(N, L)
    xp = jnp.pad(x2, ((0, 0), (1, 1)))
    k = conv_w.reshape(3)
    conv = k[0] * xp[:, 0:L] + k[1] * xp[:, 1:L + 1] + k[2] * xp[:, 2:L + 2] + conv_b[0]
    h = jnp.where(conv >= 0, conv, 0.1 * conv)
    h1 = h @ w1 + b1
    h1 = jnp.where(h1 >= 0, h1, 0.05 * h1)
    h2 = h1 @ w2 + b2
    return jax.nn.sigmoid(h2).reshape(N, 1, -1)


def init_params(key, in_features, midlayer1, out_features, scale=0.2):
    """Deterministic synthetic parameters. PyTorch Linear stores (out, in);
       we keep the matmul-ready (in, out) layout -- same math."""
    ks = jax.random.split(key, 6)
    conv_w = jax.random.normal(ks[0], (1, 1, 3), jnp.float32) * 0.3
    conv_b = jax.random.normal(ks[1], (1,), jnp.float32) * 0.1
    w1 = jax.random.normal(ks[2], (in_features, midlayer1), jnp.float32) * scale
    b1 = jax.random.normal(ks[3], (midlayer1,), jnp.float32) * 0.1
    w2 = jax.random.normal(ks[4], (midlayer1, out_features), jnp.float32) * scale
    b2 = jax.random.normal(ks[5], (out_features,), jnp.float32) * 0.1
    return conv_w, conv_b, w1, b1, w2, b2


if __name__ == "__main__":
    key = jax.random.PRNGKey(0)
    k1, k2, k3, k4 = jax.random.split(key, 4)

    # 1) Toy shape from the spec: CNNNet(input=8, output=4, midlayer1=32,
    #    midlayer2=16)  (midlayer2 / self.fulllinear are unused by forward()).
    #    O=4 < 128 -> batch-on-lanes (lane-dense) path.
    N, IN, M1, OUT = 2, 8, 32, 4
    x = jax.random.normal(k1, (N, 1, IN), jnp.float32)           # NCL, C=1
    params = init_params(k2, IN, M1, OUT)
    y = cnnnet_forward(x, params)
    jax.block_until_ready(y)
    assert y.shape == (N, 1, OUT), y.shape
    err = float(jnp.max(jnp.abs(y - reference_forward(x, params))))
    assert err < 2e-2, f"batch-major path: max abs err vs reference: {err}"

    # 2) Wide-output shape -> feature-major path (features already lane-dense),
    #    2-step pipelined batch grid; all-f32 matmuls at these sizes.
    N2, IN2, M12, OUT2 = 16, 64, 96, 128
    x2 = jax.random.normal(k3, (N2, 1, IN2), jnp.float32)
    params2 = init_params(k4, IN2, M12, OUT2, scale=0.05)
    y2 = cnnnet_forward(x2, params2)
    jax.block_until_ready(y2)
    assert y2.shape == (N2, 1, OUT2), y2.shape
    err2 = float(jnp.max(jnp.abs(y2 - reference_forward(x2, params2))))
    assert err2 < 2e-2, f"feature-major path: max abs err vs reference: {err2}"

    print("KERNEL_OK")
</pallas_src>

<mosaic_0001>
module attributes {stable_mosaic.version = 11 : i64} {
  func.func @_kernel_batch_major(%arg0: i32, %arg1: memref<4xf32, #tpu.memory_space<smem>>, %arg2: memref<8x2xf32, #tpu.memory_space<vmem>>, %arg3: memref<32x8xf32, #tpu.memory_space<vmem>>, %arg4: memref<32x1xf32, #tpu.memory_space<vmem>>, %arg5: memref<4x32xf32, #tpu.memory_space<vmem>>, %arg6: memref<4x1xf32, #tpu.memory_space<vmem>>, %arg7: memref<4x2xf32, #tpu.memory_space<vmem>>) attributes {dimension_semantics = [#tpu.dimension_semantics<parallel>], iteration_bounds = array<i64: 1>, scalar_prefetch = 0 : i64, scratch_operands = 0 : i64, tpu.core_type = #tpu.core_type<tc>, window_params = [{transform_indices = @transform_0, window_bounds = array<i64: 4>}, {transform_indices = @transform_1, window_bounds = array<i64: 8, 2>}, {pipeline_mode = #tpu.pipeline_mode<synchronous>, transform_indices = @transform_2, window_bounds = array<i64: 32, 8>}, {pipeline_mode = #tpu.pipeline_mode<synchronous>, transform_indices = @transform_3, window_bounds = array<i64: 32, 1>}, {pipeline_mode = #tpu.pipeline_mode<synchronous>, transform_indices = @transform_4, window_bounds = array<i64: 4, 32>}, {pipeline_mode = #tpu.pipeline_mode<synchronous>, transform_indices = @transform_5, window_bounds = array<i64: 4, 1>}, {transform_indices = @transform_6, window_bounds = array<i64: 4, 2>}]} {
    %c0 = arith.constant 0 : index
    %c0_0 = arith.constant 0 : index
    %0 = vector.load %arg2[%c0, %c0_0] : memref<8x2xf32, #tpu.memory_space<vmem>>, vector<8x2xf32>
    %c0_1 = arith.constant 0 : index
    %1 = memref.load %arg1[%c0_1] : memref<4xf32, #tpu.memory_space<smem>>
    %c1 = arith.constant 1 : index
    %2 = memref.load %arg1[%c1] : memref<4xf32, #tpu.memory_space<smem>>
    %c2 = arith.constant 2 : index
    %3 = memref.load %arg1[%c2] : memref<4xf32, #tpu.memory_space<smem>>
    %c3 = arith.constant 3 : index
    %4 = memref.load %arg1[%c3] : memref<4xf32, #tpu.memory_space<smem>>
    %cst = arith.constant 0.000000e+00 : f32
    %5 = vector.broadcast %cst : f32 to vector<1x2xf32>
    %6 = vector.extract_strided_slice %0 {offsets = [0, 0], sizes = [7, 2], strides = [1, 1]} : vector<8x2xf32> to vector<7x2xf32>
    %7 = tpu.concatenate %5, %6 in 0 : vector<1x2xf32>, vector<7x2xf32> -> vector<8x2xf32>
    %8 = vector.extract_strided_slice %0 {offsets = [1, 0], sizes = [7, 2], strides = [1, 1]} : vector<8x2xf32> to vector<7x2xf32>
    %9 = tpu.concatenate %8, %5 in 0 : vector<7x2xf32>, vector<1x2xf32> -> vector<8x2xf32>
    %10 = vector.broadcast %1 : f32 to vector<8x2xf32>
    %11 = arith.mulf %10, %7 : vector<8x2xf32>
    %12 = vector.broadcast %2 : f32 to vector<8x2xf32>
    %13 = arith.mulf %12, %0 : vector<8x2xf32>
    %14 = arith.addf %11, %13 : vector<8x2xf32>
    %15 = vector.broadcast %3 : f32 to vector<8x2xf32>
    %16 = arith.mulf %15, %9 : vector<8x2xf32>
    %17 = arith.addf %14, %16 : vector<8x2xf32>
    %18 = vector.broadcast %4 : f32 to vector<8x2xf32>
    %19 = arith.addf %17, %18 : vector<8x2xf32>
    %cst_2 = arith.constant 0.000000e+00 : f32
    %20 = vector.broadcast %cst_2 : f32 to vector<8x2xf32>
    %21 = arith.cmpf oge, %19, %20 : vector<8x2xf32>
    %cst_3 = arith.constant 1.000000e-01 : f32
    %22 = vector.broadcast %cst_3 : f32 to vector<8x2xf32>
    %23 = arith.mulf %22, %19 : vector<8x2xf32>
    %24 = arith.select %21, %19, %23 : vector<8x2xi1>, vector<8x2xf32>
    %c0_4 = arith.constant 0 : index
    %c0_5 = arith.constant 0 : index
    %25 = vector.load %arg3[%c0_4, %c0_5] : memref<32x8xf32, #tpu.memory_space<vmem>>, vector<32x8xf32>
    %cst_6 = arith.constant dense<0.000000e+00> : vector<32x2xf32>
    %26 = tpu.matmul %25, %24, %cst_6 {dimension_numbers = #tpu.dot_dimension_numbers<[1], [0], [0], [1], [0, 0, 1, 1], [], []>} : vector<32x8xf32>, vector<8x2xf32>, vector<32x2xf32> -> vector<32x2xf32>
    %c0_7 = arith.constant 0 : index
    %c0_8 = arith.constant 0 : index
    %27 = vector.load %arg4[%c0_7, %c0_8] : memref<32x1xf32, #tpu.memory_space<vmem>>, vector<32x1xf32>
    %28 = vector.broadcast %27 : vector<32x1xf32> to vector<32x2xf32>
    %29 = arith.addf %26, %28 : vector<32x2xf32>
    %cst_9 = arith.constant 0.000000e+00 : f32
    %30 = vector.broadcast %cst_9 : f32 to vector<32x2xf32>
    %31 = arith.cmpf oge, %29, %30 : vector<32x2xf32>
    %cst_10 = arith.constant 5.000000e-02 : f32
    %32 = vector.broadcast %cst_10 : f32 to vector<32x2xf32>
    %33 = arith.mulf %32, %29 : vector<32x2xf32>
    %34 = arith.select %31, %29, %33 : vector<32x2xi1>, vector<32x2xf32>
    %c0_11 = arith.constant 0 : index
    %c0_12 = arith.constant 0 : index
    %35 = vector.load %arg5[%c0_11, %c0_12] : memref<4x32xf32, #tpu.memory_space<vmem>>, vector<4x32xf32>
    %cst_13 = arith.constant dense<0.000000e+00> : vector<4x2xf32>
    %36 = tpu.matmul %35, %34, %cst_13 {dimension_numbers = #tpu.dot_dimension_numbers<[1], [0], [0], [1], [0, 0, 1, 1], [], []>} : vector<4x32xf32>, vector<32x2xf32>, vector<4x2xf32> -> vector<4x2xf32>
    %c0_14 = arith.constant 0 : index
    %c0_15 = arith.constant 0 : index
    %37 = vector.load %arg6[%c0_14, %c0_15] : memref<4x1xf32, #tpu.memory_space<vmem>>, vector<4x1xf32>
    %38 = vector.broadcast %37 : vector<4x1xf32> to vector<4x2xf32>
    %39 = arith.addf %36, %38 : vector<4x2xf32>
    %40 = arith.negf %39 : vector<4x2xf32>
    %41 = math.exp %40 : vector<4x2xf32>
    %cst_16 = arith.constant 1.000000e+00 : f32
    %42 = vector.broadcast %cst_16 : f32 to vector<4x2xf32>
    %43 = arith.addf %42, %41 : vector<4x2xf32>
    %44 = arith.divf %42, %43 : vector<4x2xf32>
    %c0_17 = arith.constant 0 : index
    %c0_18 = arith.constant 0 : index
    %45 = vector.load %arg7[%c0_17, %c0_18] : memref<4x2xf32, #tpu.memory_space<vmem>>, vector<4x2xf32>
    tpu.vector_store %arg7[%c0_17, %c0_18], %44 {strides = array<i32>} : memref<4x2xf32, #tpu.memory_space<vmem>>, vector<4x2xf32>,
    return
  }
  func.func @transform_0(%arg0: i32) -> i32 {
    %c0_i32 = arith.constant 0 : i32
    %c0_i32_0 = arith.constant 0 : i32
    return %c0_i32 : i32
  }
  func.func @transform_1(%arg0: i32) -> (i32, i32) {
    %c0_i32 = arith.constant 0 : i32
    %c0_i32_0 = arith.constant 0 : i32
    return %c0_i32, %arg0 : i32, i32
  }
  func.func @transform_2(%arg0: i32) -> (i32, i32) {
    %c0_i32 = arith.constant 0 : i32
    %c0_i32_0 = arith.constant 0 : i32
    %c0_i32_1 = arith.constant 0 : i32
    return %c0_i32, %c0_i32_0 : i32, i32
  }
  func.func @transform_3(%arg0: i32) -> (i32, i32) {
    %c0_i32 = arith.constant 0 : i32
    %c0_i32_0 = arith.constant 0 : i32
    %c0_i32_1 = arith.constant 0 : i32
    return %c0_i32, %c0_i32_0 : i32, i32
  }
  func.func @transform_4(%arg0: i32) -> (i32, i32) {
    %c0_i32 = arith.constant 0 : i32
    %c0_i32_0 = arith.constant 0 : i32
    %c0_i32_1 = arith.constant 0 : i32
    return %c0_i32, %c0_i32_0 : i32, i32
  }
  func.func @transform_5(%arg0: i32) -> (i32, i32) {
    %c0_i32 = arith.constant 0 : i32
    %c0_i32_0 = arith.constant 0 : i32
    %c0_i32_1 = arith.constant 0 : i32
    return %c0_i32, %c0_i32_0 : i32, i32
  }
  func.func @transform_6(%arg0: i32) -> (i32, i32) {
    %c0_i32 = arith.constant 0 : i32
    %c0_i32_0 = arith.constant 0 : i32
    return %c0_i32, %arg0 : i32, i32
  }
}

</mosaic_0001>

<llo_original>
// kernel: tpu_custom_call.1
$region0: #{tpu_custom_call.1}
  #allocation0 [shape = 'u32[]', space=smem, size = 0x4, offset = 0x4, fixed_abs, tag = 'smem constant byte address 0x4 - core index']
  #allocation1 [shape = 'u32[72,128]{1,0:T(1,128)}', space=vmem, size = 0x9000, scoped, tag = 'internal scratch']
  %s0 = inlined_call_operand.vmem [shape: f32[4], index: 0, kind: input, shape index: {}]
  %s1 = inlined_call_operand.vmem [shape: f32[8,2], index: 1, kind: input, shape index: {}]
  %s2 = inlined_call_operand.vmem [shape: f32[32,8], index: 2, kind: input, shape index: {}]
  %s3 = inlined_call_operand.vmem [shape: f32[32,1], index: 3, kind: input, shape index: {}]
  %s4 = inlined_call_operand.vmem [shape: f32[4,32], index: 4, kind: input, shape index: {}]
  %s5 = inlined_call_operand.vmem [shape: f32[4,1], index: 5, kind: input, shape index: {}]
  %s6 = inlined_call_operand.vmem [shape: f32[4,2], index: 6, kind: output, shape index: {}]
  %s7 = sld [smem:[#allocation0]]
  $region38: #{tpu_custom_call.1} parent=0
    _
  %s9 = ssub.s32 1, %s7
  %s10 = scalar_select 0, %s9, %s7
  $region1: #{tpu_custom_call.1} parent=0
    #allocation2 [shape = 'u8[512]{0}', space=smem, size = 0x200, scoped, tag = 'input window, operand 0, single buffered']
    #allocation3 [shape = 's32[1]{0}', space=sflag, size = 0x4, scoped, tag = 'scoped memory for tpu_custom_call.1']
    %11 = vsyncpa [#allocation3], 0
    // Predicated region
    $region2: #{tpu_custom_call.1} parent=1 // pred_check
      _
    $region3: #{tpu_custom_call.1} parent=1 // pred_check_branch
      %13 = sbr.rel (0) target = $region5
    $region4: #{tpu_custom_call.1} parent=1 // pred_region
      %15 = vsyncadd [#allocation3], 0
      %s17 = sshll.u32 %s0, 4
      %s18 = int_to_ptr.vmem [resolvable:$true] %s17
      %20 = dma.vmem_to_smem %s18, 16, [#allocation2], [#allocation3]
    $region5: #{tpu_custom_call.1} parent=1 // pred_fallthru
      _
    // Predicated region
    $region6: #{tpu_custom_call.1} parent=1 // pred_check
      _
    $region7: #{tpu_custom_call.1} parent=1 // pred_check_branch
      %22 = sbr.rel (0) target = $region9
    $region8: #{tpu_custom_call.1} parent=1 // pred_region
      _
    $region9: #{tpu_custom_call.1} parent=1 // pred_fallthru
      _
    // Predicated region
    $region10: #{tpu_custom_call.1} parent=1 // pred_check
      _
    $region11: #{tpu_custom_call.1} parent=1 // pred_check_branch
      %24 = sbr.rel (0) target = $region13
    $region12: #{tpu_custom_call.1} parent=1 // pred_region
      _
    $region13: #{tpu_custom_call.1} parent=1 // pred_fallthru
      _
    // Predicated region
    $region14: #{tpu_custom_call.1} parent=1 // pred_check
      _
    $region15: #{tpu_custom_call.1} parent=1 // pred_check_branch
      %26 = sbr.rel (0) target = $region17
    $region16: #{tpu_custom_call.1} parent=1 // pred_region
      _
    $region17: #{tpu_custom_call.1} parent=1 // pred_fallthru
      _
    // Predicated region
    $region18: #{tpu_custom_call.1} parent=1 // pred_check
      _
    $region19: #{tpu_custom_call.1} parent=1 // pred_check_branch
      %28 = sbr.rel (0) target = $region21
    $region20: #{tpu_custom_call.1} parent=1 // pred_region
      _
    $region21: #{tpu_custom_call.1} parent=1 // pred_fallthru
      _
    // Predicated region
    $region22: #{tpu_custom_call.1} parent=1 // pred_check
      _
    $region23: #{tpu_custom_call.1} parent=1 // pred_check_branch
      %30 = sbr.rel (0) target = $region25
    $region24: #{tpu_custom_call.1} parent=1 // pred_region
      _
    $region25: #{tpu_custom_call.1} parent=1 // pred_fallthru
      _
    // Predicated region
    $region26: #{tpu_custom_call.1} parent=1 // pred_check
      _
    $region27: #{tpu_custom_call.1} parent=1 // pred_check_branch
      %32 = sbr.rel (0) target = $region29
    $region28: #{tpu_custom_call.1} parent=1 // pred_region
      %34 = dma.done [#allocation3], 16
    $region29: #{tpu_custom_call.1} parent=1 // pred_fallthru
      _
    %35 = sfence
    %v36 = vld [vmem:[%s1] sm:$0xff]
    %s37 = sld [smem:[#allocation2]]
    %s38 = sld [smem:[#allocation2 + $0x1]]
    %s39 = sld [smem:[#allocation2 + $0x2]]
    %s40 = sld [smem:[#allocation2 + $0x3]]
    %v42 = vrot.slane %v36, 7
    %vm44 = vcmask 1040384
    %v45 = vsel %vm44, 0.0, %v42
    %v46 = vrot.slane %v36, 1
    %vm48 = vcmask 1046528
    %v49 = vsel %vm48, %v46, 0.0
    %v50 = vstv %s37
    %v51 = vmul.f32 %v50, %v45
    %v52 = vstv %s38
    %v53 = vmul.f32 %v52, %v36
    %v54 = vadd.f32 %v51, %v53
    %v55 = vstv %s39
    %v56 = vmul.f32 %v55, %v49
    %v57 = vadd.f32 %v54, %v56
    %v58 = vstv %s40
    %v59 = vadd.f32 %v57, %v58
    %vm60 = vcmp.ge.f32.partialorder %v59, 0.0
    %v61 = vmul.f32 %v59, 0.1
    %v62 = vsel %vm60, %v59, %v61
    %v63 = vld [vmem:[%s2] sm:$0xff]
    %v64 = vld [vmem:[%s2 + $0x8] sm:$0xff]
    %v65 = vld [vmem:[%s2 + $0x10] sm:$0xff]
    %v66 = vld [vmem:[%s2 + $0x18] sm:$0xff]
    %v67 = vld [vmem:[%s3] sm:$0xff]
    %v68 = vld [vmem:[%s3 + $0x8] sm:$0xff]
    %v69 = vld [vmem:[%s3 + $0x10] sm:$0xff]
    %v70 = vld [vmem:[%s3 + $0x18] sm:$0xff]
    %72 = vset.pattern.permute.xlu0 0
    %73 = vperm.xlu0 %72, %v67
    %v74 = vpop.permute.xlu0 %73
    %77 = vset.pattern.permute.xlu0 0
    %78 = vperm.xlu0 %77, %v68
    %v79 = vpop.permute.xlu0 %78
    %82 = vset.pattern.permute.xlu0 0
    %83 = vperm.xlu0 %82, %v69
    %v84 = vpop.permute.xlu0 %83
    %87 = vset.pattern.permute.xlu0 0
    %88 = vperm.xlu0 %87, %v70
    %v89 = vpop.permute.xlu0 %88
    %vm91 = vcmask 64512
    %v93 = vsel %vm91, %v63, 0
    %v96 = vsel %vm91, %v64, 0
    %v99 = vsel %vm91, %v65, 0
    %v102 = vsel %vm91, %v66, 0
    %104 = vmatpush.msra.mxu0 0.0
    %105 = vmatpush.msra.mxu0 0.0
    %106 = vmatpush.msra.mxu0 0.0
    %107 = vmatpush.msra.mxu0 0.0
    %108 = vmatpush.msra.mxu0 0.0
    %109 = vmatpush.msra.mxu0 0.0
    %110 = vmatpush.msra.mxu0 0.0
    %111 = vmatpush.msra.mxu0 0.0
    %112 = vmatpush.msra.mxu0 0.0
    %113 = vmatpush.msra.mxu0 0.0
    %114 = vmatpush.msra.mxu0 0.0
    %115 = vmatpush.msra.mxu0 0.0
    %116 = vmatpush.msra.mxu0 0.0
    %117 = vmatpush.msra.mxu0 0.0
    %118 = vmatpush.msra.mxu0 0.0
    %119 = vmatpush.msra.mxu0 %v62
    %120 = vmatmul.f32.gmra.mxu0 %v93
    %v121 = vpop.f32.mrf.mxu0
    %v122 = vadd.f32 %v74, %v121
    %123 = vmatmul.f32.gmra.mxu0 %v96
    %v124 = vpop.f32.mrf.mxu0
    %v125 = vadd.f32 %v79, %v124
    %126 = vmatmul.f32.gmra.mxu0 %v99
    %v127 = vpop.f32.mrf.mxu0
    %v128 = vadd.f32 %v84, %v127
    %129 = vmatmul.f32.gmra.mxu0 %v102
    %v130 = vpop.f32.mrf.mxu0
    %v131 = vadd.f32 %v89, %v130
    %132 = vdwg.mxu0
    %vm133 = vcmp.ge.f32.partialorder %v122, 0.0
    %vm134 = vcmp.ge.f32.partialorder %v125, 0.0
    %vm135 = vcmp.ge.f32.partialorder %v128, 0.0
    %vm136 = vcmp.ge.f32.partialorder %v131, 0.0
    %v137 = vmul.f32 %v122, 0.05
    %v138 = vmul.f32 %v125, 0.05
    %v139 = vmul.f32 %v128, 0.05
    %v140 = vmul.f32 %v131, 0.05
    %v141 = vsel %vm133, %v122, %v137
    %v142 = vsel %vm134, %v125, %v138
    %v143 = vsel %vm135, %v128, %v139
    %v144 = vsel %vm136, %v131, %v140
    %v145 = vld [vmem:[%s4] sm:$0xf]
    %v146 = vld [vmem:[%s5] sm:$0xf]
    %148 = vset.pattern.permute.xlu0 0
    %149 = vperm.xlu0 %148, %v146
    %v150 = vpop.permute.xlu0 %149
    %vm152 = vcmask 261120
    %v154 = vsel %vm152, %v145, 0
    %156 = vmatpush.msra.mxu0 0.0
    %157 = vmatpush.msra.mxu0 0.0
    %158 = vmatpush.msra.mxu0 0.0
    %159 = vmatpush.msra.mxu0 0.0
    %160 = vmatpush.msra.mxu0 0.0
    %161 = vmatpush.msra.mxu0 0.0
    %162 = vmatpush.msra.mxu0 0.0
    %163 = vmatpush.msra.mxu0 0.0
    %164 = vmatpush.msra.mxu0 0.0
    %165 = vmatpush.msra.mxu0 0.0
    %166 = vmatpush.msra.mxu0 0.0
    %167 = vmatpush.msra.mxu0 0.0
    %168 = vmatpush.msra.mxu0 %v144
    %169 = vmatpush.msra.mxu0 %v143
    %170 = vmatpush.msra.mxu0 %v142
    %171 = vmatpush.msra.mxu0 %v141
    %172 = vmatmul.f32.gmra.mxu0 %v154
    %v173 = vpop.f32.mrf.mxu0
    %v174 = vadd.f32 %v150, %v173
    %175 = vdwg.mxu0
    %v176 = vxor.u32 %v174, 2147483648
    %v177 = vmul.f32 %v176, 1.442695
    %v178 = vpow.pop %v177
    %v179 = vadd.f32 %v178, 1.0
    %v180 = vrcp.pop %v179
    %v181 = vmul.f32 %v179, %v180
    %v182 = vsub.f32 1.0, %v181
    %v183 = vmul.f32 %v180, %v182
    %v184 = vadd.f32 %v180, %v183
    %vm185 = vweird.f32 %v179
    %vm186 = vweird.f32 %v180
    %vm187 = vmor %vm185, %vm186
    %v188 = vsel %vm187, %v180, %v184
    %v189 = vand.u32 2147483647, %v179
    %vm190 = vcmp.eq.f32.partialorder %v189, 8.507059e+37
    %v191 = vand.u32 %v179, 2147483648
    %v192 = vor.u32 1.1754944e-38, %v191
    %v193 = vsel %vm190, %v192, %v188
    %v194 = vmul.f32 1.0, %v193
    %vm195 = vcmask 11264
    %196 = vst.msk [vmem:[%s6] sm:$0xf] %vm195, %v194
    // Predicated region
    $region30: #{tpu_custom_call.1} parent=1 // pred_check
      _
    $region31: #{tpu_custom_call.1} parent=1 // pred_check_branch
      %198 = sbr.rel (0) target = $region33
    $region32: #{tpu_custom_call.1} parent=1 // pred_region
      _
    $region33: #{tpu_custom_call.1} parent=1 // pred_fallthru
      _
    // Predicated region
    $region34: #{tpu_custom_call.1} parent=1 // pred_check
      _
    $region35: #{tpu_custom_call.1} parent=1 // pred_check_branch
      %200 = sbr.rel (0) target = $region37
    $region36: #{tpu_custom_call.1} parent=1 // pred_region
      _
    $region37: #{tpu_custom_call.1} parent=1 // pred_fallthru
      _
    %201 = vsyncpa [#allocation3], 1

</llo_original>
